<compile_context>
chip_gen: v7x
topology: tpu7x:2x2x1
jax: 0.10.0
libtpu: 0.0.40
codegen_flags: <defaults>
</compile_context>

<pallas_src>
import functools

import jax
import jax.numpy as jnp
import numpy as np
from jax.experimental import pallas as pl
from jax.experimental.pallas import tpu as pltpu


def _group_norm_kernel(x_ref, w_ref, b_ref, gamma_ref, beta_ref, o_ref, *,
                       num_groups, dim_hidden, eps):
    """Lane-dense refs:
         x_ref    : (B, TN*D)  input block (full batch, node tile)
         w_ref    : (G, TN*D)  group_func weight tiled per node (grid-constant)
         b_ref    : (G,)       group_func bias (SMEM)
         gamma_ref: (G, TN*D)  skip_weight * BN gamma  (per group/node/feature)
         beta_ref : (1, TN*D)  skip_weight * sum_g BN beta
         o_ref    : (B, TN*D)  output block
    """
    D = dim_hidden
    G = num_groups
    x = x_ref[...].astype(jnp.float32)                       # (B, L)
    B, L = x.shape
    w = w_ref[...].astype(jnp.float32)                       # (G, L)
    gam = gamma_ref[...].astype(jnp.float32)                 # (G, L)

    # ---- size-D lane-segment all-reduce (hypercube butterfly on the XLU) ----
    # After log2(D) steps every lane within a node's D contiguous lanes holds
    # that node's segment sum, i.e. the per-node dot product is already
    # broadcast over the node's D lanes (no reshape / no broadcast-back).
    # Select masks are derived from a rolled lane-index iota (computed once,
    # shared by all groups), so the result is independent of the roll
    # direction convention.
    lane = jax.lax.broadcasted_iota(jnp.int32, (B, L), 1)
    shifts, masks = [], []
    s = 1
    while s < D:
        masks.append(pltpu.roll(lane, s, axis=1) == (lane ^ s))
        shifts.append(s)
        s *= 2

    def segment_allreduce_sum(v):
        for sh, take_a in zip(shifts, masks):
            a = pltpu.roll(v, sh, axis=1)
            b = pltpu.roll(v, L - sh, axis=1)                # circularly == roll by -sh
            v = v + jnp.where(take_a, a, b)
        return v

    # ---- group scores: softmax(Linear(x)) over the group axis ---------------
    # logit[b, n, g] = sum_d x[b, n*D+d] * w[g, d] + bias[g], broadcast over d.
    logits = [segment_allreduce_sum(x * w[g:g + 1, :]) + b_ref[g] for g in range(G)]
    m = logits[0]
    for g in range(1, G):
        m = jnp.maximum(m, logits[g])
    e = [jnp.exp(lg - m) for lg in logits]
    denom = e[0]
    for g in range(1, G):
        denom = denom + e[g]
    r = pl.reciprocal(denom, approx=True)                    # EUP slot (otherwise idle)
    r = r * (2.0 - denom * r)                                # one Newton step -> ~f32 exact
    xs = x * r                                               # hoisted: scores_g*x == e[g]*xs

    # ---- per-group training-mode BatchNorm (biased var) + sum over groups ---
    # skip_weight and gamma are pre-folded into `gam`; beta is added once below.
    inv_b = 1.0 / B
    acc = jnp.zeros_like(x)
    for g in range(G):                                       # static unroll, G is small
        y = e[g] * xs                                        # scores_g * x
        mean = jnp.sum(y, axis=0, keepdims=True) * inv_b     # per-feature mean over batch
        diff = y - mean
        var = jnp.sum(diff * diff, axis=0, keepdims=True) * inv_b
        acc = acc + diff * (gam[g:g + 1, :] * jax.lax.rsqrt(var + eps))
    # TODO(synk): for large num_groups, stage e[]/logits through a VMEM scratch to
    # bound vreg live ranges (static unrolling keeps all groups live at once).

    o_ref[...] = (x + acc + beta_ref[...]).astype(o_ref.dtype)


def _choose_node_tile(N, D, B):
    """Largest node tile whose collapsed lane width fits a per-block VMEM budget
    (x/out are double-buffered and span the full batch), capped at 1024 lanes
    (>=86% of measured HBM roofline), preferring >= 2 grid steps so the grid
    can split across TensorCores (v7x has two per chip)."""
    candidates = [t for t in range(1, N + 1) if N % t == 0 and (t * D) % 128 == 0]
    if not candidates:
        return N                                   # tiny input: single full block
    # ~8 MiB budget across the 4 double-buffered f32 batch-sized blocks (x, out).
    budget_lanes = max(128, (8 * 1024 * 1024) // (16 * max(B, 1)))
    cap = min(1024, budget_lanes)
    good = [t for t in candidates if t * D <= cap] or [min(candidates)]
    split = [t for t in good if N // t >= 2]
    return max(split) if split else max(good)


def group_norm_forward(x, w_g, b_g, gamma, beta, *, num_groups, skip_weight,
                       eps=1e-5, node_tile=None):
    """x: (B, N, D); w_g: (G, D) torch-Linear weight; b_g: (G,);
    gamma/beta: (N*G*D,) BatchNorm1d affine params (feature order n, g, d)."""
    B, N, D = x.shape
    G = num_groups
    assert G > 1, "num_groups == 1 path (plain BatchNorm) not implemented"
    # TODO(synk): num_groups == 1 branch (self.bn(x)) has no group-score path; not implemented.
    assert D > 1 and (D & (D - 1)) == 0, "dim_hidden must be a power of two"
    TN = _choose_node_tile(N, D, B) if node_tile is None else node_tile
    assert N % TN == 0
    L = TN * D
    assert L % 128 == 0 or TN == N, "node tile must give a 128-multiple lane width"
    # NOTE: BN statistics reduce over the batch axis, so the whole batch lives
    # in one block; fine for moderate B (block ~ B*L*4 bytes, double-buffered).

    # Lane-dense layouts + parameter folding (cheap host-side reshapes).
    x_flat = x.reshape(B, N * D)
    gamma_g = (skip_weight * gamma).reshape(N, G, D).transpose(1, 0, 2).reshape(G, N * D)
    beta_sum = (skip_weight * beta).reshape(N, G, D).sum(axis=1).reshape(1, N * D)
    w_bcast = jnp.tile(w_g.astype(jnp.float32), (1, TN))     # (G, TN*D), grid-constant
    b_vec = b_g.astype(jnp.float32)                          # (G,) -> SMEM scalars

    kernel = functools.partial(_group_norm_kernel, num_groups=G, dim_hidden=D,
                               eps=float(eps))

    out_flat = pl.pallas_call(
        kernel,
        out_shape=jax.ShapeDtypeStruct((B, N * D), x.dtype),
        grid_spec=pltpu.PrefetchScalarGridSpec(
            num_scalar_prefetch=0,
            grid=(N // TN,),                     # nodes are independent for BN stats
            in_specs=[
                pl.BlockSpec((B, L), lambda i: (0, i)),                # x (lane-dense)
                pl.BlockSpec((G, L), lambda i: (0, 0)),                # w tiled (constant block)
                pl.BlockSpec(memory_space=pltpu.MemorySpace.SMEM),     # group_func bias
                pl.BlockSpec((G, L), lambda i: (0, i)),                # skip_weight * gamma
                pl.BlockSpec((1, L), lambda i: (0, i)),                # skip_weight * sum_g beta
            ],
            out_specs=pl.BlockSpec((B, L), lambda i: (0, i)),
        ),
        compiler_params=pltpu.CompilerParams(
            dimension_semantics=("parallel",),
            vmem_limit_bytes=64 * 1024 * 1024,   # raise scoped VMEM (v5e/v6e default is low)
        ),
    )(x_flat, w_bcast, b_vec, gamma_g, beta_sum)
    return out_flat.reshape(B, N, D)


def _reference(x, w_g, b_g, gamma, beta, num_groups, skip_weight, eps=1e-5):
    B, N, D = x.shape
    logits = jnp.einsum("bnd,gd->bng", x, w_g) + b_g
    scores = jax.nn.softmax(logits, axis=2)
    y = jnp.concatenate([scores[:, :, g:g + 1] * x for g in range(num_groups)],
                        axis=2)                                # (B, N, G*D)
    y = y.reshape(B, N * num_groups * D)
    mean = y.mean(axis=0)
    var = ((y - mean) ** 2).mean(axis=0)                       # biased (training-mode BN)
    yn = (y - mean) / jnp.sqrt(var + eps) * gamma + beta
    yn = yn.reshape(B, N, num_groups, D).sum(axis=2)
    return x + yn * skip_weight


if __name__ == "__main__":
    B, N, D, G = 8, 8, 16, 4          # batch, num_nodes, dim_hidden, num_groups
    skip_weight = 0.5

    key = jax.random.PRNGKey(0)
    kx, kw, kb, kgam, kbet = jax.random.split(key, 5)

    x = jax.random.normal(kx, (B, N, D), dtype=jnp.float32)

    # group_func = nn.Linear(dim_hidden, num_groups): weight (G, D), bias (G,)
    bound = 1.0 / np.sqrt(D)
    w_g = jax.random.uniform(kw, (G, D), dtype=jnp.float32, minval=-bound, maxval=bound)
    b_g = jax.random.uniform(kb, (G,), dtype=jnp.float32, minval=-bound, maxval=bound)

    # bn = nn.BatchNorm1d(D * G * N) learnable affine params (perturbed from the
    # default gamma=1, beta=0 init so the folding/reordering paths are exercised).
    gamma = 1.0 + 0.1 * jax.random.normal(kgam, (N * G * D,), dtype=jnp.float32)
    beta = 0.1 * jax.random.normal(kbet, (N * G * D,), dtype=jnp.float32)
    # TODO(synk): BN running-stat (momentum=0.3) updates are training-only state, not output math.

    out = group_norm_forward(x, w_g, b_g, gamma, beta,
                             num_groups=G, skip_weight=skip_weight)
    out = jax.block_until_ready(out)

    ref = _reference(x, w_g, b_g, gamma, beta, G, skip_weight)
    np.testing.assert_allclose(np.asarray(out), np.asarray(ref), rtol=1e-4, atol=1e-4)

    print("KERNEL_OK")
</pallas_src>

<mosaic_0001>
module attributes {stable_mosaic.version = 11 : i64} {
  func.func @_group_norm_kernel(%arg0: i32, %arg1: memref<8x128xf32, #tpu.memory_space<vmem>>, %arg2: memref<4x128xf32, #tpu.memory_space<vmem>>, %arg3: memref<4xf32, #tpu.memory_space<smem>>, %arg4: memref<4x128xf32, #tpu.memory_space<vmem>>, %arg5: memref<1x128xf32, #tpu.memory_space<vmem>>, %arg6: memref<8x128xf32, #tpu.memory_space<vmem>>) attributes {dimension_semantics = [#tpu.dimension_semantics<parallel>], iteration_bounds = array<i64: 1>, scalar_prefetch = 0 : i64, scratch_operands = 0 : i64, tpu.core_type = #tpu.core_type<tc>, window_params = [{transform_indices = @transform_0, window_bounds = array<i64: 8, 128>}, {pipeline_mode = #tpu.pipeline_mode<synchronous>, transform_indices = @transform_1, window_bounds = array<i64: 4, 128>}, {transform_indices = @transform_2, window_bounds = array<i64: 4>}, {transform_indices = @transform_3, window_bounds = array<i64: 4, 128>}, {transform_indices = @transform_4, window_bounds = array<i64: 1, 128>}, {transform_indices = @transform_5, window_bounds = array<i64: 8, 128>}]} {
    %c0 = arith.constant 0 : index
    %c0_0 = arith.constant 0 : index
    %0 = vector.load %arg1[%c0, %c0_0] : memref<8x128xf32, #tpu.memory_space<vmem>>, vector<8x128xf32>
    %c0_1 = arith.constant 0 : index
    %c0_2 = arith.constant 0 : index
    %1 = vector.load %arg2[%c0_1, %c0_2] : memref<4x128xf32, #tpu.memory_space<vmem>>, vector<4x128xf32>
    %c0_3 = arith.constant 0 : index
    %c0_4 = arith.constant 0 : index
    %2 = vector.load %arg4[%c0_3, %c0_4] : memref<4x128xf32, #tpu.memory_space<vmem>>, vector<4x128xf32>
    %3 = tpu.iota {dimensions = array<i32: 1>} : vector<8x128xi32>
    %c1_i32 = arith.constant 1 : i32
    %4 = tpu.dynamic_rotate %3 by %c1_i32 dim 1 : vector<8x128xi32>, i32 -> vector<8x128xi32>
    %c1_i32_5 = arith.constant 1 : i32
    %5 = vector.broadcast %c1_i32_5 : i32 to vector<8x128xi32>
    %6 = arith.xori %3, %5 : vector<8x128xi32>
    %7 = arith.cmpi eq, %4, %6 : vector<8x128xi32>
    %c2_i32 = arith.constant 2 : i32
    %8 = tpu.dynamic_rotate %3 by %c2_i32 dim 1 : vector<8x128xi32>, i32 -> vector<8x128xi32>
    %c2_i32_6 = arith.constant 2 : i32
    %9 = vector.broadcast %c2_i32_6 : i32 to vector<8x128xi32>
    %10 = arith.xori %3, %9 : vector<8x128xi32>
    %11 = arith.cmpi eq, %8, %10 : vector<8x128xi32>
    %c4_i32 = arith.constant 4 : i32
    %12 = tpu.dynamic_rotate %3 by %c4_i32 dim 1 : vector<8x128xi32>, i32 -> vector<8x128xi32>
    %c4_i32_7 = arith.constant 4 : i32
    %13 = vector.broadcast %c4_i32_7 : i32 to vector<8x128xi32>
    %14 = arith.xori %3, %13 : vector<8x128xi32>
    %15 = arith.cmpi eq, %12, %14 : vector<8x128xi32>
    %c8_i32 = arith.constant 8 : i32
    %16 = tpu.dynamic_rotate %3 by %c8_i32 dim 1 : vector<8x128xi32>, i32 -> vector<8x128xi32>
    %c8_i32_8 = arith.constant 8 : i32
    %17 = vector.broadcast %c8_i32_8 : i32 to vector<8x128xi32>
    %18 = arith.xori %3, %17 : vector<8x128xi32>
    %19 = arith.cmpi eq, %16, %18 : vector<8x128xi32>
    %20 = vector.extract_strided_slice %1 {offsets = [0, 0], sizes = [1, 128], strides = [1, 1]} : vector<4x128xf32> to vector<1x128xf32>
    %21 = vector.broadcast %20 : vector<1x128xf32> to vector<8x128xf32>
    %22 = arith.mulf %0, %21 : vector<8x128xf32>
    %c1_i32_9 = arith.constant 1 : i32
    %23 = tpu.dynamic_rotate %22 by %c1_i32_9 dim 1 : vector<8x128xf32>, i32 -> vector<8x128xf32>
    %c127_i32 = arith.constant 127 : i32
    %24 = tpu.dynamic_rotate %22 by %c127_i32 dim 1 : vector<8x128xf32>, i32 -> vector<8x128xf32>
    %25 = arith.select %7, %23, %24 : vector<8x128xi1>, vector<8x128xf32>
    %26 = arith.addf %22, %25 : vector<8x128xf32>
    %c2_i32_10 = arith.constant 2 : i32
    %27 = tpu.dynamic_rotate %26 by %c2_i32_10 dim 1 : vector<8x128xf32>, i32 -> vector<8x128xf32>
    %c126_i32 = arith.constant 126 : i32
    %28 = tpu.dynamic_rotate %26 by %c126_i32 dim 1 : vector<8x128xf32>, i32 -> vector<8x128xf32>
    %29 = arith.select %11, %27, %28 : vector<8x128xi1>, vector<8x128xf32>
    %30 = arith.addf %26, %29 : vector<8x128xf32>
    %c4_i32_11 = arith.constant 4 : i32
    %31 = tpu.dynamic_rotate %30 by %c4_i32_11 dim 1 : vector<8x128xf32>, i32 -> vector<8x128xf32>
    %c124_i32 = arith.constant 124 : i32
    %32 = tpu.dynamic_rotate %30 by %c124_i32 dim 1 : vector<8x128xf32>, i32 -> vector<8x128xf32>
    %33 = arith.select %15, %31, %32 : vector<8x128xi1>, vector<8x128xf32>
    %34 = arith.addf %30, %33 : vector<8x128xf32>
    %c8_i32_12 = arith.constant 8 : i32
    %35 = tpu.dynamic_rotate %34 by %c8_i32_12 dim 1 : vector<8x128xf32>, i32 -> vector<8x128xf32>
    %c120_i32 = arith.constant 120 : i32
    %36 = tpu.dynamic_rotate %34 by %c120_i32 dim 1 : vector<8x128xf32>, i32 -> vector<8x128xf32>
    %37 = arith.select %19, %35, %36 : vector<8x128xi1>, vector<8x128xf32>
    %38 = arith.addf %34, %37 : vector<8x128xf32>
    %c0_13 = arith.constant 0 : index
    %39 = memref.load %arg3[%c0_13] : memref<4xf32, #tpu.memory_space<smem>>
    %40 = vector.broadcast %39 : f32 to vector<8x128xf32>
    %41 = arith.addf %38, %40 : vector<8x128xf32>
    %42 = vector.extract_strided_slice %1 {offsets = [1, 0], sizes = [1, 128], strides = [1, 1]} : vector<4x128xf32> to vector<1x128xf32>
    %43 = vector.broadcast %42 : vector<1x128xf32> to vector<8x128xf32>
    %44 = arith.mulf %0, %43 : vector<8x128xf32>
    %c1_i32_14 = arith.constant 1 : i32
    %45 = tpu.dynamic_rotate %44 by %c1_i32_14 dim 1 : vector<8x128xf32>, i32 -> vector<8x128xf32>
    %c127_i32_15 = arith.constant 127 : i32
    %46 = tpu.dynamic_rotate %44 by %c127_i32_15 dim 1 : vector<8x128xf32>, i32 -> vector<8x128xf32>
    %47 = arith.select %7, %45, %46 : vector<8x128xi1>, vector<8x128xf32>
    %48 = arith.addf %44, %47 : vector<8x128xf32>
    %c2_i32_16 = arith.constant 2 : i32
    %49 = tpu.dynamic_rotate %48 by %c2_i32_16 dim 1 : vector<8x128xf32>, i32 -> vector<8x128xf32>
    %c126_i32_17 = arith.constant 126 : i32
    %50 = tpu.dynamic_rotate %48 by %c126_i32_17 dim 1 : vector<8x128xf32>, i32 -> vector<8x128xf32>
    %51 = arith.select %11, %49, %50 : vector<8x128xi1>, vector<8x128xf32>
    %52 = arith.addf %48, %51 : vector<8x128xf32>
    %c4_i32_18 = arith.constant 4 : i32
    %53 = tpu.dynamic_rotate %52 by %c4_i32_18 dim 1 : vector<8x128xf32>, i32 -> vector<8x128xf32>
    %c124_i32_19 = arith.constant 124 : i32
    %54 = tpu.dynamic_rotate %52 by %c124_i32_19 dim 1 : vector<8x128xf32>, i32 -> vector<8x128xf32>
    %55 = arith.select %15, %53, %54 : vector<8x128xi1>, vector<8x128xf32>
    %56 = arith.addf %52, %55 : vector<8x128xf32>
    %c8_i32_20 = arith.constant 8 : i32
    %57 = tpu.dynamic_rotate %56 by %c8_i32_20 dim 1 : vector<8x128xf32>, i32 -> vector<8x128xf32>
    %c120_i32_21 = arith.constant 120 : i32
    %58 = tpu.dynamic_rotate %56 by %c120_i32_21 dim 1 : vector<8x128xf32>, i32 -> vector<8x128xf32>
    %59 = arith.select %19, %57, %58 : vector<8x128xi1>, vector<8x128xf32>
    %60 = arith.addf %56, %59 : vector<8x128xf32>
    %c1 = arith.constant 1 : index
    %61 = memref.load %arg3[%c1] : memref<4xf32, #tpu.memory_space<smem>>
    %62 = vector.broadcast %61 : f32 to vector<8x128xf32>
    %63 = arith.addf %60, %62 : vector<8x128xf32>
    %64 = vector.extract_strided_slice %1 {offsets = [2, 0], sizes = [1, 128], strides = [1, 1]} : vector<4x128xf32> to vector<1x128xf32>
    %65 = vector.broadcast %64 : vector<1x128xf32> to vector<8x128xf32>
    %66 = arith.mulf %0, %65 : vector<8x128xf32>
    %c1_i32_22 = arith.constant 1 : i32
    %67 = tpu.dynamic_rotate %66 by %c1_i32_22 dim 1 : vector<8x128xf32>, i32 -> vector<8x128xf32>
    %c127_i32_23 = arith.constant 127 : i32
    %68 = tpu.dynamic_rotate %66 by %c127_i32_23 dim 1 : vector<8x128xf32>, i32 -> vector<8x128xf32>
    %69 = arith.select %7, %67, %68 : vector<8x128xi1>, vector<8x128xf32>
    %70 = arith.addf %66, %69 : vector<8x128xf32>
    %c2_i32_24 = arith.constant 2 : i32
    %71 = tpu.dynamic_rotate %70 by %c2_i32_24 dim 1 : vector<8x128xf32>, i32 -> vector<8x128xf32>
    %c126_i32_25 = arith.constant 126 : i32
    %72 = tpu.dynamic_rotate %70 by %c126_i32_25 dim 1 : vector<8x128xf32>, i32 -> vector<8x128xf32>
    %73 = arith.select %11, %71, %72 : vector<8x128xi1>, vector<8x128xf32>
    %74 = arith.addf %70, %73 : vector<8x128xf32>
    %c4_i32_26 = arith.constant 4 : i32
    %75 = tpu.dynamic_rotate %74 by %c4_i32_26 dim 1 : vector<8x128xf32>, i32 -> vector<8x128xf32>
    %c124_i32_27 = arith.constant 124 : i32
    %76 = tpu.dynamic_rotate %74 by %c124_i32_27 dim 1 : vector<8x128xf32>, i32 -> vector<8x128xf32>
    %77 = arith.select %15, %75, %76 : vector<8x128xi1>, vector<8x128xf32>
    %78 = arith.addf %74, %77 : vector<8x128xf32>
    %c8_i32_28 = arith.constant 8 : i32
    %79 = tpu.dynamic_rotate %78 by %c8_i32_28 dim 1 : vector<8x128xf32>, i32 -> vector<8x128xf32>
    %c120_i32_29 = arith.constant 120 : i32
    %80 = tpu.dynamic_rotate %78 by %c120_i32_29 dim 1 : vector<8x128xf32>, i32 -> vector<8x128xf32>
    %81 = arith.select %19, %79, %80 : vector<8x128xi1>, vector<8x128xf32>
    %82 = arith.addf %78, %81 : vector<8x128xf32>
    %c2 = arith.constant 2 : index
    %83 = memref.load %arg3[%c2] : memref<4xf32, #tpu.memory_space<smem>>
    %84 = vector.broadcast %83 : f32 to vector<8x128xf32>
    %85 = arith.addf %82, %84 : vector<8x128xf32>
    %86 = vector.extract_strided_slice %1 {offsets = [3, 0], sizes = [1, 128], strides = [1, 1]} : vector<4x128xf32> to vector<1x128xf32>
    %87 = vector.broadcast %86 : vector<1x128xf32> to vector<8x128xf32>
    %88 = arith.mulf %0, %87 : vector<8x128xf32>
    %c1_i32_30 = arith.constant 1 : i32
    %89 = tpu.dynamic_rotate %88 by %c1_i32_30 dim 1 : vector<8x128xf32>, i32 -> vector<8x128xf32>
    %c127_i32_31 = arith.constant 127 : i32
    %90 = tpu.dynamic_rotate %88 by %c127_i32_31 dim 1 : vector<8x128xf32>, i32 -> vector<8x128xf32>
    %91 = arith.select %7, %89, %90 : vector<8x128xi1>, vector<8x128xf32>
    %92 = arith.addf %88, %91 : vector<8x128xf32>
    %c2_i32_32 = arith.constant 2 : i32
    %93 = tpu.dynamic_rotate %92 by %c2_i32_32 dim 1 : vector<8x128xf32>, i32 -> vector<8x128xf32>
    %c126_i32_33 = arith.constant 126 : i32
    %94 = tpu.dynamic_rotate %92 by %c126_i32_33 dim 1 : vector<8x128xf32>, i32 -> vector<8x128xf32>
    %95 = arith.select %11, %93, %94 : vector<8x128xi1>, vector<8x128xf32>
    %96 = arith.addf %92, %95 : vector<8x128xf32>
    %c4_i32_34 = arith.constant 4 : i32
    %97 = tpu.dynamic_rotate %96 by %c4_i32_34 dim 1 : vector<8x128xf32>, i32 -> vector<8x128xf32>
    %c124_i32_35 = arith.constant 124 : i32
    %98 = tpu.dynamic_rotate %96 by %c124_i32_35 dim 1 : vector<8x128xf32>, i32 -> vector<8x128xf32>
    %99 = arith.select %15, %97, %98 : vector<8x128xi1>, vector<8x128xf32>
    %100 = arith.addf %96, %99 : vector<8x128xf32>
    %c8_i32_36 = arith.constant 8 : i32
    %101 = tpu.dynamic_rotate %100 by %c8_i32_36 dim 1 : vector<8x128xf32>, i32 -> vector<8x128xf32>
    %c120_i32_37 = arith.constant 120 : i32
    %102 = tpu.dynamic_rotate %100 by %c120_i32_37 dim 1 : vector<8x128xf32>, i32 -> vector<8x128xf32>
    %103 = arith.select %19, %101, %102 : vector<8x128xi1>, vector<8x128xf32>
    %104 = arith.addf %100, %103 : vector<8x128xf32>
    %c3 = arith.constant 3 : index
    %105 = memref.load %arg3[%c3] : memref<4xf32, #tpu.memory_space<smem>>
    %106 = vector.broadcast %105 : f32 to vector<8x128xf32>
    %107 = arith.addf %104, %106 : vector<8x128xf32>
    %108 = arith.maximumf %41, %63 : vector<8x128xf32>
    %109 = arith.maximumf %108, %85 : vector<8x128xf32>
    %110 = arith.maximumf %109, %107 : vector<8x128xf32>
    %111 = arith.subf %41, %110 : vector<8x128xf32>
    %112 = math.exp %111 : vector<8x128xf32>
    %113 = arith.subf %63, %110 : vector<8x128xf32>
    %114 = math.exp %113 : vector<8x128xf32>
    %115 = arith.subf %85, %110 : vector<8x128xf32>
    %116 = math.exp %115 : vector<8x128xf32>
    %117 = arith.subf %107, %110 : vector<8x128xf32>
    %118 = math.exp %117 : vector<8x128xf32>
    %119 = arith.addf %112, %114 : vector<8x128xf32>
    %120 = arith.addf %119, %116 : vector<8x128xf32>
    %121 = arith.addf %120, %118 : vector<8x128xf32>
    %122 = tpu.reciprocal %121 {approx = true} : vector<8x128xf32> -> vector<8x128xf32>
    %123 = arith.mulf %121, %122 : vector<8x128xf32>
    %cst = arith.constant 2.000000e+00 : f32
    %124 = vector.broadcast %cst : f32 to vector<8x128xf32>
    %125 = arith.subf %124, %123 : vector<8x128xf32>
    %126 = arith.mulf %122, %125 : vector<8x128xf32>
    %127 = arith.mulf %0, %126 : vector<8x128xf32>
    %cst_38 = arith.constant 0.000000e+00 : f32
    %128 = vector.broadcast %cst_38 : f32 to vector<8x128xf32>
    %129 = arith.mulf %112, %127 : vector<8x128xf32>
    %cst_39 = arith.constant dense<0.000000e+00> : vector<128xf32>
    %130 = vector.multi_reduction <add>, %129, %cst_39 [0] : vector<8x128xf32> to vector<128xf32>
    %131 = vector.shape_cast %130 : vector<128xf32> to vector<1x128xf32>
    %cst_40 = arith.constant 1.250000e-01 : f32
    %132 = vector.broadcast %cst_40 : f32 to vector<1x128xf32>
    %133 = arith.mulf %131, %132 : vector<1x128xf32>
    %134 = vector.broadcast %133 : vector<1x128xf32> to vector<8x128xf32>
    %135 = arith.subf %129, %134 : vector<8x128xf32>
    %136 = arith.mulf %135, %135 : vector<8x128xf32>
    %cst_41 = arith.constant dense<0.000000e+00> : vector<128xf32>
    %137 = vector.multi_reduction <add>, %136, %cst_41 [0] : vector<8x128xf32> to vector<128xf32>
    %138 = vector.shape_cast %137 : vector<128xf32> to vector<1x128xf32>
    %cst_42 = arith.constant 1.250000e-01 : f32
    %139 = vector.broadcast %cst_42 : f32 to vector<1x128xf32>
    %140 = arith.mulf %138, %139 : vector<1x128xf32>
    %141 = vector.extract_strided_slice %2 {offsets = [0, 0], sizes = [1, 128], strides = [1, 1]} : vector<4x128xf32> to vector<1x128xf32>
    %cst_43 = arith.constant 9.99999974E-6 : f32
    %142 = vector.broadcast %cst_43 : f32 to vector<1x128xf32>
    %143 = arith.addf %140, %142 : vector<1x128xf32>
    %144 = math.rsqrt %143 : vector<1x128xf32>
    %145 = arith.mulf %141, %144 : vector<1x128xf32>
    %146 = vector.broadcast %145 : vector<1x128xf32> to vector<8x128xf32>
    %147 = arith.mulf %135, %146 : vector<8x128xf32>
    %148 = arith.addf %128, %147 : vector<8x128xf32>
    %149 = arith.mulf %114, %127 : vector<8x128xf32>
    %cst_44 = arith.constant dense<0.000000e+00> : vector<128xf32>
    %150 = vector.multi_reduction <add>, %149, %cst_44 [0] : vector<8x128xf32> to vector<128xf32>
    %151 = vector.shape_cast %150 : vector<128xf32> to vector<1x128xf32>
    %cst_45 = arith.constant 1.250000e-01 : f32
    %152 = vector.broadcast %cst_45 : f32 to vector<1x128xf32>
    %153 = arith.mulf %151, %152 : vector<1x128xf32>
    %154 = vector.broadcast %153 : vector<1x128xf32> to vector<8x128xf32>
    %155 = arith.subf %149, %154 : vector<8x128xf32>
    %156 = arith.mulf %155, %155 : vector<8x128xf32>
    %cst_46 = arith.constant dense<0.000000e+00> : vector<128xf32>
    %157 = vector.multi_reduction <add>, %156, %cst_46 [0] : vector<8x128xf32> to vector<128xf32>
    %158 = vector.shape_cast %157 : vector<128xf32> to vector<1x128xf32>
    %cst_47 = arith.constant 1.250000e-01 : f32
    %159 = vector.broadcast %cst_47 : f32 to vector<1x128xf32>
    %160 = arith.mulf %158, %159 : vector<1x128xf32>
    %161 = vector.extract_strided_slice %2 {offsets = [1, 0], sizes = [1, 128], strides = [1, 1]} : vector<4x128xf32> to vector<1x128xf32>
    %cst_48 = arith.constant 9.99999974E-6 : f32
    %162 = vector.broadcast %cst_48 : f32 to vector<1x128xf32>
    %163 = arith.addf %160, %162 : vector<1x128xf32>
    %164 = math.rsqrt %163 : vector<1x128xf32>
    %165 = arith.mulf %161, %164 : vector<1x128xf32>
    %166 = vector.broadcast %165 : vector<1x128xf32> to vector<8x128xf32>
    %167 = arith.mulf %155, %166 : vector<8x128xf32>
    %168 = arith.addf %148, %167 : vector<8x128xf32>
    %169 = arith.mulf %116, %127 : vector<8x128xf32>
    %cst_49 = arith.constant dense<0.000000e+00> : vector<128xf32>
    %170 = vector.multi_reduction <add>, %169, %cst_49 [0] : vector<8x128xf32> to vector<128xf32>
    %171 = vector.shape_cast %170 : vector<128xf32> to vector<1x128xf32>
    %cst_50 = arith.constant 1.250000e-01 : f32
    %172 = vector.broadcast %cst_50 : f32 to vector<1x128xf32>
    %173 = arith.mulf %171, %172 : vector<1x128xf32>
    %174 = vector.broadcast %173 : vector<1x128xf32> to vector<8x128xf32>
    %175 = arith.subf %169, %174 : vector<8x128xf32>
    %176 = arith.mulf %175, %175 : vector<8x128xf32>
    %cst_51 = arith.constant dense<0.000000e+00> : vector<128xf32>
    %177 = vector.multi_reduction <add>, %176, %cst_51 [0] : vector<8x128xf32> to vector<128xf32>
    %178 = vector.shape_cast %177 : vector<128xf32> to vector<1x128xf32>
    %cst_52 = arith.constant 1.250000e-01 : f32
    %179 = vector.broadcast %cst_52 : f32 to vector<1x128xf32>
    %180 = arith.mulf %178, %179 : vector<1x128xf32>
    %181 = vector.extract_strided_slice %2 {offsets = [2, 0], sizes = [1, 128], strides = [1, 1]} : vector<4x128xf32> to vector<1x128xf32>
    %cst_53 = arith.constant 9.99999974E-6 : f32
    %182 = vector.broadcast %cst_53 : f32 to vector<1x128xf32>
    %183 = arith.addf %180, %182 : vector<1x128xf32>
    %184 = math.rsqrt %183 : vector<1x128xf32>
    %185 = arith.mulf %181, %184 : vector<1x128xf32>
    %186 = vector.broadcast %185 : vector<1x128xf32> to vector<8x128xf32>
    %187 = arith.mulf %175, %186 : vector<8x128xf32>
    %188 = arith.addf %168, %187 : vector<8x128xf32>
    %189 = arith.mulf %118, %127 : vector<8x128xf32>
    %cst_54 = arith.constant dense<0.000000e+00> : vector<128xf32>
    %190 = vector.multi_reduction <add>, %189, %cst_54 [0] : vector<8x128xf32> to vector<128xf32>
    %191 = vector.shape_cast %190 : vector<128xf32> to vector<1x128xf32>
    %cst_55 = arith.constant 1.250000e-01 : f32
    %192 = vector.broadcast %cst_55 : f32 to vector<1x128xf32>
    %193 = arith.mulf %191, %192 : vector<1x128xf32>
    %194 = vector.broadcast %193 : vector<1x128xf32> to vector<8x128xf32>
    %195 = arith.subf %189, %194 : vector<8x128xf32>
    %196 = arith.mulf %195, %195 : vector<8x128xf32>
    %cst_56 = arith.constant dense<0.000000e+00> : vector<128xf32>
    %197 = vector.multi_reduction <add>, %196, %cst_56 [0] : vector<8x128xf32> to vector<128xf32>
    %198 = vector.shape_cast %197 : vector<128xf32> to vector<1x128xf32>
    %cst_57 = arith.constant 1.250000e-01 : f32
    %199 = vector.broadcast %cst_57 : f32 to vector<1x128xf32>
    %200 = arith.mulf %198, %199 : vector<1x128xf32>
    %201 = vector.extract_strided_slice %2 {offsets = [3, 0], sizes = [1, 128], strides = [1, 1]} : vector<4x128xf32> to vector<1x128xf32>
    %cst_58 = arith.constant 9.99999974E-6 : f32
    %202 = vector.broadcast %cst_58 : f32 to vector<1x128xf32>
    %203 = arith.addf %200, %202 : vector<1x128xf32>
    %204 = math.rsqrt %203 : vector<1x128xf32>
    %205 = arith.mulf %201, %204 : vector<1x128xf32>
    %206 = vector.broadcast %205 : vector<1x128xf32> to vector<8x128xf32>
    %207 = arith.mulf %195, %206 : vector<8x128xf32>
    %208 = arith.addf %188, %207 : vector<8x128xf32>
    %209 = arith.addf %0, %208 : vector<8x128xf32>
    %c0_59 = arith.constant 0 : index
    %c0_60 = arith.constant 0 : index
    %210 = vector.load %arg5[%c0_59, %c0_60] : memref<1x128xf32, #tpu.memory_space<vmem>>, vector<1x128xf32>
    %211 = vector.broadcast %210 : vector<1x128xf32> to vector<8x128xf32>
    %212 = arith.addf %209, %211 : vector<8x128xf32>
    %c0_61 = arith.constant 0 : index
    %c0_62 = arith.constant 0 : index
    %213 = vector.load %arg6[%c0_61, %c0_62] : memref<8x128xf32, #tpu.memory_space<vmem>>, vector<8x128xf32>
    tpu.vector_store %arg6[%c0_61, %c0_62], %212 {strides = array<i32>} : memref<8x128xf32, #tpu.memory_space<vmem>>, vector<8x128xf32>,
    return
  }
  func.func @transform_0(%arg0: i32) -> (i32, i32) {
    %c0_i32 = arith.constant 0 : i32
    %c0_i32_0 = arith.constant 0 : i32
    return %c0_i32, %arg0 : i32, i32
  }
  func.func @transform_1(%arg0: i32) -> (i32, i32) {
    %c0_i32 = arith.constant 0 : i32
    %c0_i32_0 = arith.constant 0 : i32
    %c0_i32_1 = arith.constant 0 : i32
    return %c0_i32, %c0_i32_0 : i32, i32
  }
  func.func @transform_2(%arg0: i32) -> i32 {
    %c0_i32 = arith.constant 0 : i32
    %c0_i32_0 = arith.constant 0 : i32
    return %c0_i32 : i32
  }
  func.func @transform_3(%arg0: i32) -> (i32, i32) {
    %c0_i32 = arith.constant 0 : i32
    %c0_i32_0 = arith.constant 0 : i32
    return %c0_i32, %arg0 : i32, i32
  }
  func.func @transform_4(%arg0: i32) -> (i32, i32) {
    %c0_i32 = arith.constant 0 : i32
    %c0_i32_0 = arith.constant 0 : i32
    return %c0_i32, %arg0 : i32, i32
  }
  func.func @transform_5(%arg0: i32) -> (i32, i32) {
    %c0_i32 = arith.constant 0 : i32
    %c0_i32_0 = arith.constant 0 : i32
    return %c0_i32, %arg0 : i32, i32
  }
}

</mosaic_0001>

<llo_original>
// kernel: tpu_custom_call.1
$region0: #{tpu_custom_call.1}
  #allocation0 [shape = 'u32[]', space=smem, size = 0x4, offset = 0x4, fixed_abs, tag = 'smem constant byte address 0x4 - core index']
  #allocation1 [shape = 'u32[144,128]{1,0:T(1,128)}', space=vmem, size = 0x12000, scoped, tag = 'internal scratch']
  %s0 = inlined_call_operand.hbm [shape: f32[8,128], index: 0, kind: input, shape index: {}]
  %s1 = inlined_call_operand.hbm [shape: f32[4,128], index: 1, kind: input, shape index: {}]
  %s2 = inlined_call_operand.hbm [shape: f32[4], index: 2, kind: input, shape index: {}]
  %s3 = inlined_call_operand.hbm [shape: f32[4,128], index: 3, kind: input, shape index: {}]
  %s4 = inlined_call_operand.hbm [shape: f32[1,128], index: 4, kind: input, shape index: {}]
  %s5 = inlined_call_operand.hbm [shape: f32[8,128], index: 5, kind: output, shape index: {}]
  %s6 = sld [smem:[#allocation0]]
  $region50: #{tpu_custom_call.1} parent=0
    _
  %s8 = ssub.s32 1, %s6
  %s9 = scalar_select 0, %s8, %s6
  $region1: #{tpu_custom_call.1} parent=0
    #allocation2 [shape = 'u8[4096]{0}', space=vmem, size = 0x1000, scoped, tag = 'input window, operand 0, single buffered']
    #allocation3 [shape = 's32[1]{0}', space=sflag, size = 0x4, scoped, tag = 'scoped memory for tpu_custom_call.1']
    #allocation4 [shape = 's32[1]{0}', space=sflag, size = 0x4, scoped, tag = 'scoped memory for tpu_custom_call.1']
    #allocation5 [shape = 's32[1]{0}', space=sflag, size = 0x4, scoped, tag = 'scoped memory for tpu_custom_call.1']
    #allocation6 [shape = 'u8[2048]{0}', space=vmem, size = 0x800, scoped, tag = 'input window, operand 1, single buffered']
    #allocation7 [shape = 's32[1]{0}', space=sflag, size = 0x4, scoped, tag = 'scoped memory for tpu_custom_call.1']
    #allocation8 [shape = 'u8[512]{0}', space=smem, size = 0x200, scoped, tag = 'input window, operand 2, single buffered']
    #allocation9 [shape = 'u8[2048]{0}', space=vmem, size = 0x800, scoped, tag = 'input window, operand 3, single buffered']
    #allocation10 [shape = 'u8[512]{0}', space=vmem, size = 0x400, scoped, tag = 'input window, operand 4, single buffered']
    #allocation11 [shape = 's32[1]{0}', space=sflag, size = 0x4, scoped, tag = 'scoped memory for tpu_custom_call.1']
    #allocation12 [shape = 'u8[4096]{0}', space=vmem, size = 0x1000, scoped, tag = 'output window, operand 0, single buffered']
    %10 = vsyncpa [#allocation3], 0
    %11 = vsyncpa [#allocation7], 0
    %12 = vsyncpa [#allocation5], 0
    %13 = vsyncpa [#allocation11], 0
    %14 = vsyncpa [#allocation4], 0
    // Predicated region
    $region2: #{tpu_custom_call.1} parent=1 // pred_check
      _
    $region3: #{tpu_custom_call.1} parent=1 // pred_check_branch
      %16 = sbr.rel (0) target = $region5
    $region4: #{tpu_custom_call.1} parent=1 // pred_region
      %s18 = ssub.s32 128, 128
      %19 = vsyncadd [#allocation3], %s18
      %s21 = sshll.u32 [#allocation2], 4
      %s22 = int_to_ptr.vmem [resolvable:$true] %s21
      %24 = dma.hbm_to_vmem [thread:$0]  %s0, 128, %s22, [#allocation3]
    $region5: #{tpu_custom_call.1} parent=1 // pred_fallthru
      _
    // Predicated region
    $region6: #{tpu_custom_call.1} parent=1 // pred_check
      _
    $region7: #{tpu_custom_call.1} parent=1 // pred_check_branch
      %26 = sbr.rel (0) target = $region9
    $region8: #{tpu_custom_call.1} parent=1 // pred_region
      %s28 = ssub.s32 64, 64
      %29 = vsyncadd [#allocation7], %s28
      %s31 = sshll.u32 [#allocation6], 4
      %s32 = int_to_ptr.vmem [resolvable:$true] %s31
      %34 = dma.hbm_to_vmem [thread:$0]  %s1, 64, %s32, [#allocation7]
    $region9: #{tpu_custom_call.1} parent=1 // pred_fallthru
      _
    // Predicated region
    $region10: #{tpu_custom_call.1} parent=1 // pred_check
      _
    $region11: #{tpu_custom_call.1} parent=1 // pred_check_branch
      %36 = sbr.rel (0) target = $region13
    $region12: #{tpu_custom_call.1} parent=1 // pred_region
      %s38 = ssub.s32 16, 16
      %39 = vsyncadd [#allocation5], %s38
      %42 = dma.hbm_to_smem %s2, 16, [#allocation8], [#allocation5]
    $region13: #{tpu_custom_call.1} parent=1 // pred_fallthru
      _
    // Predicated region
    $region14: #{tpu_custom_call.1} parent=1 // pred_check
      _
    $region15: #{tpu_custom_call.1} parent=1 // pred_check_branch
      %44 = sbr.rel (0) target = $region17
    $region16: #{tpu_custom_call.1} parent=1 // pred_region
      %s46 = ssub.s32 64, 64
      %47 = vsyncadd [#allocation7], %s46
      %s49 = sshll.u32 [#allocation9], 4
      %s50 = int_to_ptr.vmem [resolvable:$true] %s49
      %52 = dma.hbm_to_vmem [thread:$0]  %s3, 64, %s50, [#allocation7]
    $region17: #{tpu_custom_call.1} parent=1 // pred_fallthru
      _
    // Predicated region
    $region18: #{tpu_custom_call.1} parent=1 // pred_check
      _
    $region19: #{tpu_custom_call.1} parent=1 // pred_check_branch
      %54 = sbr.rel (0) target = $region21
    $region20: #{tpu_custom_call.1} parent=1 // pred_region
      %s56 = ssub.s32 16, 16
      %57 = vsyncadd [#allocation11], %s56
      %s59 = sshll.u32 [#allocation10], 4
      %s60 = int_to_ptr.vmem [resolvable:$true] %s59
      %62 = dma.hbm_to_vmem [thread:$0]  %s4, 16, %s60, [#allocation11]
    $region21: #{tpu_custom_call.1} parent=1 // pred_fallthru
      _
    // Predicated region
    $region22: #{tpu_custom_call.1} parent=1 // pred_check
      _
    $region23: #{tpu_custom_call.1} parent=1 // pred_check_branch
      %64 = sbr.rel (0) target = $region25
    $region24: #{tpu_custom_call.1} parent=1 // pred_region
      %65 = dma.done [#allocation3], 128
    $region25: #{tpu_custom_call.1} parent=1 // pred_fallthru
      _
    // Predicated region
    $region26: #{tpu_custom_call.1} parent=1 // pred_check
      _
    $region27: #{tpu_custom_call.1} parent=1 // pred_check_branch
      %67 = sbr.rel (0) target = $region29
    $region28: #{tpu_custom_call.1} parent=1 // pred_region
      %68 = dma.done [#allocation7], 64
    $region29: #{tpu_custom_call.1} parent=1 // pred_fallthru
      _
    // Predicated region
    $region30: #{tpu_custom_call.1} parent=1 // pred_check
      _
    $region31: #{tpu_custom_call.1} parent=1 // pred_check_branch
      %70 = sbr.rel (0) target = $region33
    $region32: #{tpu_custom_call.1} parent=1 // pred_region
      %71 = dma.done [#allocation5], 16
    $region33: #{tpu_custom_call.1} parent=1 // pred_fallthru
      _
    // Predicated region
    $region34: #{tpu_custom_call.1} parent=1 // pred_check
      _
    $region35: #{tpu_custom_call.1} parent=1 // pred_check_branch
      %73 = sbr.rel (0) target = $region37
    $region36: #{tpu_custom_call.1} parent=1 // pred_region
      %74 = dma.done [#allocation7], 64
    $region37: #{tpu_custom_call.1} parent=1 // pred_fallthru
      _
    // Predicated region
    $region38: #{tpu_custom_call.1} parent=1 // pred_check
      _
    $region39: #{tpu_custom_call.1} parent=1 // pred_check_branch
      %76 = sbr.rel (0) target = $region41
    $region40: #{tpu_custom_call.1} parent=1 // pred_region
      %77 = dma.done [#allocation11], 16
    $region41: #{tpu_custom_call.1} parent=1 // pred_fallthru
      _
    %78 = sfence
    %v79 = vld [vmem:[#allocation2] sm:$0xff]
    %v80 = vld [vmem:[#allocation6] sm:$0xf]
    %v81 = vld [vmem:[#allocation9] sm:$0xf]
    %v82 = vlaneseq
    %v83 = vand.u32 %v82, 127
    %84 = vrot.lane.b32.xlu0 %v83, 1
    %v85 = vpop.permute.xlu0 %84
    %v86 = vxor.u32 %v83, 1
    %vm87 = vcmp.eq.s32.totalorder %v85, %v86
    %88 = vrot.lane.b32.xlu0 %v83, 2
    %v89 = vpop.permute.xlu0 %88
    %v90 = vxor.u32 %v83, 2
    %vm91 = vcmp.eq.s32.totalorder %v89, %v90
    %92 = vrot.lane.b32.xlu0 %v83, 4
    %v93 = vpop.permute.xlu0 %92
    %v94 = vxor.u32 %v83, 4
    %vm95 = vcmp.eq.s32.totalorder %v93, %v94
    %96 = vrot.lane.b32.xlu0 %v83, 8
    %v97 = vpop.permute.xlu0 %96
    %v98 = vxor.u32 %v83, 8
    %vm99 = vcmp.eq.s32.totalorder %v97, %v98
    %v100 = vlaneseq
    %v101 = vshrl.u32 %v100, 7
    %v102 = vsub.s32 0, %v101
    %v103 = vrot.slane %v80, %v102
    %v104 = vmul.f32 %v79, %v103
    %105 = vrot.lane.b32.xlu0 %v104, 1
    %v106 = vpop.permute.xlu0 %105
    %107 = vrot.lane.b32.xlu0 %v104, 127
    %v108 = vpop.permute.xlu0 %107
    %v109 = vsel %vm87, %v106, %v108
    %v110 = vadd.f32 %v104, %v109
    %111 = vrot.lane.b32.xlu0 %v110, 2
    %v112 = vpop.permute.xlu0 %111
    %113 = vrot.lane.b32.xlu0 %v110, 126
    %v114 = vpop.permute.xlu0 %113
    %v115 = vsel %vm91, %v112, %v114
    %v116 = vadd.f32 %v110, %v115
    %117 = vrot.lane.b32.xlu0 %v116, 4
    %v118 = vpop.permute.xlu0 %117
    %119 = vrot.lane.b32.xlu0 %v116, 124
    %v120 = vpop.permute.xlu0 %119
    %v121 = vsel %vm95, %v118, %v120
    %v122 = vadd.f32 %v116, %v121
    %123 = vrot.lane.b32.xlu0 %v122, 8
    %v124 = vpop.permute.xlu0 %123
    %125 = vrot.lane.b32.xlu0 %v122, 120
    %v126 = vpop.permute.xlu0 %125
    %v127 = vsel %vm99, %v124, %v126
    %v128 = vadd.f32 %v122, %v127
    %s129 = sld [smem:[#allocation8]]
    %v130 = vstv %s129
    %v131 = vadd.f32 %v128, %v130
    %v132 = vlaneseq
    %v133 = vshrl.u32 %v132, 7
    %v134 = vsub.s32 1, %v133
    %v135 = vrot.slane %v80, %v134
    %v136 = vmul.f32 %v79, %v135
    %137 = vrot.lane.b32.xlu0 %v136, 1
    %v138 = vpop.permute.xlu0 %137
    %139 = vrot.lane.b32.xlu0 %v136, 127
    %v140 = vpop.permute.xlu0 %139
    %v141 = vsel %vm87, %v138, %v140
    %v142 = vadd.f32 %v136, %v141
    %143 = vrot.lane.b32.xlu0 %v142, 2
    %v144 = vpop.permute.xlu0 %143
    %145 = vrot.lane.b32.xlu0 %v142, 126
    %v146 = vpop.permute.xlu0 %145
    %v147 = vsel %vm91, %v144, %v146
    %v148 = vadd.f32 %v142, %v147
    %149 = vrot.lane.b32.xlu0 %v148, 4
    %v150 = vpop.permute.xlu0 %149
    %151 = vrot.lane.b32.xlu0 %v148, 124
    %v152 = vpop.permute.xlu0 %151
    %v153 = vsel %vm95, %v150, %v152
    %v154 = vadd.f32 %v148, %v153
    %155 = vrot.lane.b32.xlu0 %v154, 8
    %v156 = vpop.permute.xlu0 %155
    %157 = vrot.lane.b32.xlu0 %v154, 120
    %v158 = vpop.permute.xlu0 %157
    %v159 = vsel %vm99, %v156, %v158
    %v160 = vadd.f32 %v154, %v159
    %s161 = sld [smem:[#allocation8 + $0x1]]
    %v162 = vstv %s161
    %v163 = vadd.f32 %v160, %v162
    %v164 = vlaneseq
    %v165 = vshrl.u32 %v164, 7
    %v166 = vsub.s32 2, %v165
    %v167 = vrot.slane %v80, %v166
    %v168 = vmul.f32 %v79, %v167
    %169 = vrot.lane.b32.xlu0 %v168, 1
    %v170 = vpop.permute.xlu0 %169
    %171 = vrot.lane.b32.xlu0 %v168, 127
    %v172 = vpop.permute.xlu0 %171
    %v173 = vsel %vm87, %v170, %v172
    %v174 = vadd.f32 %v168, %v173
    %175 = vrot.lane.b32.xlu0 %v174, 2
    %v176 = vpop.permute.xlu0 %175
    %177 = vrot.lane.b32.xlu0 %v174, 126
    %v178 = vpop.permute.xlu0 %177
    %v179 = vsel %vm91, %v176, %v178
    %v180 = vadd.f32 %v174, %v179
    %181 = vrot.lane.b32.xlu0 %v180, 4
    %v182 = vpop.permute.xlu0 %181
    %183 = vrot.lane.b32.xlu0 %v180, 124
    %v184 = vpop.permute.xlu0 %183
    %v185 = vsel %vm95, %v182, %v184
    %v186 = vadd.f32 %v180, %v185
    %187 = vrot.lane.b32.xlu0 %v186, 8
    %v188 = vpop.permute.xlu0 %187
    %189 = vrot.lane.b32.xlu0 %v186, 120
    %v190 = vpop.permute.xlu0 %189
    %v191 = vsel %vm99, %v188, %v190
    %v192 = vadd.f32 %v186, %v191
    %s193 = sld [smem:[#allocation8 + $0x2]]
    %v194 = vstv %s193
    %v195 = vadd.f32 %v192, %v194
    %v196 = vlaneseq
    %v197 = vshrl.u32 %v196, 7
    %v198 = vsub.s32 3, %v197
    %v199 = vrot.slane %v80, %v198
    %v200 = vmul.f32 %v79, %v199
    %201 = vrot.lane.b32.xlu0 %v200, 1
    %v202 = vpop.permute.xlu0 %201
    %203 = vrot.lane.b32.xlu0 %v200, 127
    %v204 = vpop.permute.xlu0 %203
    %v205 = vsel %vm87, %v202, %v204
    %v206 = vadd.f32 %v200, %v205
    %207 = vrot.lane.b32.xlu0 %v206, 2
    %v208 = vpop.permute.xlu0 %207
    %209 = vrot.lane.b32.xlu0 %v206, 126
    %v210 = vpop.permute.xlu0 %209
    %v211 = vsel %vm91, %v208, %v210
    %v212 = vadd.f32 %v206, %v211
    %213 = vrot.lane.b32.xlu0 %v212, 4
    %v214 = vpop.permute.xlu0 %213
    %215 = vrot.lane.b32.xlu0 %v212, 124
    %v216 = vpop.permute.xlu0 %215
    %v217 = vsel %vm95, %v214, %v216
    %v218 = vadd.f32 %v212, %v217
    %219 = vrot.lane.b32.xlu0 %v218, 8
    %v220 = vpop.permute.xlu0 %219
    %221 = vrot.lane.b32.xlu0 %v218, 120
    %v222 = vpop.permute.xlu0 %221
    %v223 = vsel %vm99, %v220, %v222
    %v224 = vadd.f32 %v218, %v223
    %s225 = sld [smem:[#allocation8 + $0x3]]
    %v226 = vstv %s225
    %v227 = vadd.f32 %v224, %v226
    %v228 = vmax.f32 %v131, %v163
    %v229 = vmax.f32 %v228, %v195
    %v230 = vmax.f32 %v229, %v227
    %v231 = vsub.f32 %v131, %v230
    %v232 = vmul.f32 %v231, 1.442695
    %v233 = vpow.pop %v232
    %v234 = vsub.f32 %v163, %v230
    %v235 = vmul.f32 %v234, 1.442695
    %v236 = vpow.pop %v235
    %v237 = vsub.f32 %v195, %v230
    %v238 = vmul.f32 %v237, 1.442695
    %v239 = vpow.pop %v238
    %v240 = vsub.f32 %v227, %v230
    %v241 = vmul.f32 %v240, 1.442695
    %v242 = vpow.pop %v241
    %v243 = vadd.f32 %v233, %v236
    %v244 = vadd.f32 %v243, %v239
    %v245 = vadd.f32 %v244, %v242
    %v246 = vrcp.pop %v245
    %v247 = vmul.f32 %v245, %v246
    %v248 = vsub.f32 2.0, %v247
    %v249 = vmul.f32 %v246, %v248
    %v250 = vmul.f32 %v79, %v249
    %v251 = vmul.f32 %v233, %v250
    %v252 = vrot.slane %v251, 4
    %v253 = vadd.f32 %v251, %v252
    %v254 = vrot.slane %v253, 2
    %v255 = vadd.f32 %v253, %v254
    %v256 = vrot.slane %v255, 1
    %v257 = vadd.f32 %v255, %v256
    %v258 = vmul.f32 %v257, 0.125
    %v259 = vsub.f32 %v251, %v258
    %v260 = vmul.f32 %v259, %v259
    %v261 = vrot.slane %v260, 4
    %v262 = vadd.f32 %v260, %v261
    %v263 = vrot.slane %v262, 2
    %v264 = vadd.f32 %v262, %v263
    %v265 = vrot.slane %v264, 1
    %v266 = vadd.f32 %v264, %v265
    %v267 = vmul.f32 %v266, 0.125
    %v268 = vadd.f32 %v267, 1e-05
    %v269 = vrsqrt.pop %v268
    %v270 = vmul.f32 %v81, %v269
    %v271 = vlaneseq
    %v272 = vshrl.u32 %v271, 7
    %v273 = vsub.s32 0, %v272
    %v274 = vrot.slane %v270, %v273
    %v275 = vmul.f32 %v259, %v274
    %v276 = vadd.f32 %v275, 0.0
    %v277 = vmul.f32 %v236, %v250
    %v278 = vrot.slane %v277, 4
    %v279 = vadd.f32 %v277, %v278
    %v280 = vrot.slane %v279, 2
    %v281 = vadd.f32 %v279, %v280
    %v282 = vrot.slane %v281, 1
    %v283 = vadd.f32 %v281, %v282
    %v284 = vmul.f32 %v283, 0.125
    %v285 = vsub.f32 %v277, %v284
    %v286 = vmul.f32 %v285, %v285
    %v287 = vrot.slane %v286, 4
    %v288 = vadd.f32 %v286, %v287
    %v289 = vrot.slane %v288, 2
    %v290 = vadd.f32 %v288, %v289
    %v291 = vrot.slane %v290, 1
    %v292 = vadd.f32 %v290, %v291
    %v293 = vmul.f32 %v292, 0.125
    %v294 = vadd.f32 %v293, 1e-05
    %v295 = vrsqrt.pop %v294
    %v296 = vmul.f32 %v81, %v295
    %v297 = vlaneseq
    %v298 = vshrl.u32 %v297, 7
    %v299 = vsub.s32 1, %v298
    %v300 = vrot.slane %v296, %v299
    %v301 = vmul.f32 %v285, %v300
    %v302 = vadd.f32 %v276, %v301
    %v303 = vmul.f32 %v239, %v250
    %v304 = vrot.slane %v303, 4
    %v305 = vadd.f32 %v303, %v304
    %v306 = vrot.slane %v305, 2
    %v307 = vadd.f32 %v305, %v306
    %v308 = vrot.slane %v307, 1
    %v309 = vadd.f32 %v307, %v308
    %v310 = vmul.f32 %v309, 0.125
    %v311 = vsub.f32 %v303, %v310
    %v312 = vmul.f32 %v311, %v311
    %v313 = vrot.slane %v312, 4
    %v314 = vadd.f32 %v312, %v313
    %v315 = vrot.slane %v314, 2
    %v316 = vadd.f32 %v314, %v315
    %v317 = vrot.slane %v316, 1
    %v318 = vadd.f32 %v316, %v317
    %v319 = vmul.f32 %v318, 0.125
    %v320 = vadd.f32 %v319, 1e-05
    %v321 = vrsqrt.pop %v320
    %v322 = vmul.f32 %v81, %v321
    %v323 = vlaneseq
    %v324 = vshrl.u32 %v323, 7
    %v325 = vsub.s32 2, %v324
    %v326 = vrot.slane %v322, %v325
    %v327 = vmul.f32 %v311, %v326
    %v328 = vadd.f32 %v302, %v327
    %v329 = vmul.f32 %v242, %v250
    %v330 = vrot.slane %v329, 4
    %v331 = vadd.f32 %v329, %v330
    %v332 = vrot.slane %v331, 2
    %v333 = vadd.f32 %v331, %v332
    %v334 = vrot.slane %v333, 1
    %v335 = vadd.f32 %v333, %v334
    %v336 = vmul.f32 %v335, 0.125
    %v337 = vsub.f32 %v329, %v336
    %v338 = vmul.f32 %v337, %v337
    %v339 = vrot.slane %v338, 4
    %v340 = vadd.f32 %v338, %v339
    %v341 = vrot.slane %v340, 2
    %v342 = vadd.f32 %v340, %v341
    %v343 = vrot.slane %v342, 1
    %v344 = vadd.f32 %v342, %v343
    %v345 = vmul.f32 %v344, 0.125
    %v346 = vadd.f32 %v345, 1e-05
    %v347 = vrsqrt.pop %v346
    %v348 = vmul.f32 %v81, %v347
    %v349 = vlaneseq
    %v350 = vshrl.u32 %v349, 7
    %v351 = vsub.s32 3, %v350
    %v352 = vrot.slane %v348, %v351
    %v353 = vmul.f32 %v337, %v352
    %v354 = vadd.f32 %v328, %v353
    %v355 = vadd.f32 %v79, %v354
    %v356 = vld [vmem:[#allocation10] sm:$0x1]
    %v358 = vlaneseq
    %v359 = vshrl.u32 %v358, 7
    %v360 = vsub.s32 0, %v359
    %v361 = vrot.slane %v356, %v360
    %v363 = vadd.f32 %v355, %v361
    %364 = vst [vmem:[#allocation12] sm:$0xff] %v363
    // Predicated region
    $region42: #{tpu_custom_call.1} parent=1 // pred_check
      _
    $region43: #{tpu_custom_call.1} parent=1 // pred_check_branch
      %366 = sbr.rel (0) target = $region45
    $region44: #{tpu_custom_call.1} parent=1 // pred_region
      %s368 = ssub.s32 128, 128
      %369 = vsyncadd [#allocation4], %s368
      %s371 = sshll.u32 [#allocation12], 4
      %s372 = int_to_ptr.vmem [resolvable:$true] %s371
      %374 = dma.vmem_to_hbm [thread:$0]  %s372, 128, %s5, [#allocation4]
    $region45: #{tpu_custom_call.1} parent=1 // pred_fallthru
      _
    // Predicated region
    $region46: #{tpu_custom_call.1} parent=1 // pred_check
      _
    $region47: #{tpu_custom_call.1} parent=1 // pred_check_branch
      %376 = sbr.rel (0) target = $region49
    $region48: #{tpu_custom_call.1} parent=1 // pred_region
      %377 = dma.done [#allocation4], 128
    $region49: #{tpu_custom_call.1} parent=1 // pred_fallthru
      _
    %378 = vsyncpa [#allocation3], 1
    %379 = vsyncpa [#allocation7], 1
    %380 = vsyncpa [#allocation11], 1
    %381 = vsyncpa [#allocation4], 1
    %382 = vsyncpa [#allocation5], 1

</llo_original>
